<compile_context>
chip_gen: v6e
topology: v6e:2x2x1
jax: 0.10.0
libtpu: 0.0.40
codegen_flags: <defaults>
</compile_context>

<pallas_src>
from functools import partial

import jax
import jax.numpy as jnp
from jax.experimental import pallas as pl
from jax.experimental.pallas import tpu as pltpu


def _scheduler_kernel(gain_ref, out_ref):
    # forward() -> 1.0 ; forward hook: _scale(output) = output * gain
    out_ref[0, 0] = jnp.float32(1.0) * gain_ref[0, 0]


@jax.jit
def scheduler_forward(gain: jnp.ndarray) -> jnp.ndarray:
    """BaseScheduler forward pass (including the gain hook) as one dispatch."""
    gain2d = jnp.asarray(gain, jnp.float32).reshape(1, 1)
    out = pl.pallas_call(
        _scheduler_kernel,
        out_shape=jax.ShapeDtypeStruct((1, 1), jnp.float32),
        in_specs=[pl.BlockSpec(memory_space=pltpu.MemorySpace.SMEM)],
        out_specs=pl.BlockSpec(memory_space=pltpu.MemorySpace.SMEM),
    )(gain2d)
    return out[0, 0]


class BaseScheduler:
    """JAX/Pallas port of todd BaseScheduler."""

    def __init__(self, gain: float = 1.0) -> None:
        self._gain = float(gain)
        # register_buffer('_steps', torch.tensor(1)) — kept host-side: it does
        # not influence the base scheduler's value, so no device traffic.
        self._steps = 1

    @property
    def gain(self) -> float:
        return self._gain

    @property
    def steps(self) -> int:
        return self._steps

    @steps.setter
    def steps(self, value: int) -> None:
        self._steps = int(value)

    def step(self) -> None:
        self._steps += 1

    def __call__(self) -> jnp.ndarray:
        return scheduler_forward(jnp.float32(self._gain))


if __name__ == "__main__":
    # Deterministic "parameter" setup; PRNGKey used even though the module has
    # no random weights.
    key = jax.random.PRNGKey(0)
    gain = float(jax.random.uniform(key, (), minval=1.0, maxval=10.0))

    sched = BaseScheduler(gain=gain)
    v1 = jax.block_until_ready(sched())
    sched.step()
    v2 = jax.block_until_ready(sched())

    expected = jnp.float32(1.0 * gain)
    assert jnp.allclose(v1, expected), (v1, expected)
    assert jnp.allclose(v2, expected), (v2, expected)
    assert sched.steps == 2

    # Docstring example: gain=5 -> scheduler() == 5.0 before and after step()
    doc = BaseScheduler(gain=5)
    d1 = jax.block_until_ready(doc())
    doc.step()
    d2 = jax.block_until_ready(doc())
    assert jnp.allclose(d1, 5.0) and jnp.allclose(d2, 5.0)

    print("KERNEL_OK")
</pallas_src>

<mosaic_0001>
module attributes {stable_mosaic.version = 11 : i64} {
  func.func @_scheduler_kernel(%arg0: memref<1x1xf32, #tpu.memory_space<smem>>, %arg1: memref<1x1xf32, #tpu.memory_space<smem>>) attributes {dimension_semantics = [], scalar_prefetch = 0 : i64, scratch_operands = 0 : i64, tpu.core_type = #tpu.core_type<tc>} {
    %c0 = arith.constant 0 : index
    %c0_0 = arith.constant 0 : index
    %0 = memref.load %arg0[%c0, %c0_0] : memref<1x1xf32, #tpu.memory_space<smem>>
    %cst = arith.constant 1.000000e+00 : f32
    %1 = arith.mulf %cst, %0 : f32
    %c0_1 = arith.constant 0 : index
    %c0_2 = arith.constant 0 : index
    %2 = memref.load %arg1[%c0_1, %c0_2] : memref<1x1xf32, #tpu.memory_space<smem>>
    memref.store %1, %arg1[%c0_1, %c0_2] : memref<1x1xf32, #tpu.memory_space<smem>>
    return
  }
}

</mosaic_0001>

<llo_original>
// kernel: scheduler_forward.1
$region0: #{scheduler_forward.1}
  #allocation0 [shape = 'u32[]', space=smem, size = 0x4, offset = 0x4, fixed_abs, tag = 'smem constant byte address 0x4 - core index']
  #allocation1 [shape = 'u32[144,128]{1,0:T(1,128)}', space=vmem, size = 0x12000, scoped, tag = 'internal scratch']
  #allocation2 [shape = 'f32[1,1]{1,0:T(1,128)S(6)}', space=smem, size = 0x200, scoped, tag = 'scoped memory for scheduler_forward.1']
  %s0 = inlined_call_operand.<no memory space> [shape: f32[1,1], index: 0, kind: input, shape index: {}]
  %s1 = inlined_call_operand.hbm [shape: f32[1,1], index: 1, kind: output, shape index: {}]
  %s2 = sld [smem:[#allocation0]]
  $region14: #{scheduler_forward.1} parent=0
    _
  %s4 = ssub.s32 1, %s2
  %s5 = scalar_select 0, %s4, %s2
  %6 = sst [smem:[#allocation2]] %s0
  $region1: #{scheduler_forward.1} parent=0
    #allocation3 [shape = 'u8[512]{0}', space=smem, size = 0x200, scoped, tag = 'output window, operand 0, single buffered']
    #allocation4 [shape = 's32[1]{0}', space=sflag, size = 0x4, scoped, tag = 'scoped memory for scheduler_forward.1']
    %7 = vsyncpa [#allocation4], 0
    // Predicated region
    $region2: #{scheduler_forward.1} parent=1 // pred_check
      _
    $region3: #{scheduler_forward.1} parent=1 // pred_check_branch
      %9 = sbr.rel (0) target = $region5
    $region4: #{scheduler_forward.1} parent=1 // pred_region
      _
    $region5: #{scheduler_forward.1} parent=1 // pred_fallthru
      _
    %s10 = sld [smem:[#allocation2]]
    %s11 = scalar_lea.smem [#allocation3], 0
    %12 = sst [smem:[%s11]] %s10
    // Predicated region
    $region6: #{scheduler_forward.1} parent=1 // pred_check
      _
    $region7: #{scheduler_forward.1} parent=1 // pred_check_branch
      %14 = sbr.rel (0) target = $region9
    $region8: #{scheduler_forward.1} parent=1 // pred_region
      %s16 = ssub.s32 16, 16
      %17 = vsyncadd [#allocation4], %s16
      %20 = dma.smem_to_hbm [#allocation3], 16, %s1, [#allocation4]
    $region9: #{scheduler_forward.1} parent=1 // pred_fallthru
      _
    // Predicated region
    $region10: #{scheduler_forward.1} parent=1 // pred_check
      _
    $region11: #{scheduler_forward.1} parent=1 // pred_check_branch
      %22 = sbr.rel (0) target = $region13
    $region12: #{scheduler_forward.1} parent=1 // pred_region
      %23 = dma.done [#allocation4], 16
    $region13: #{scheduler_forward.1} parent=1 // pred_fallthru
      _
    %24 = sfence
    %25 = vsyncpa [#allocation4], 1

</llo_original>
